<compile_context>
chip_gen: v7x
topology: tpu7x:2x2x1
jax: 0.10.0
libtpu: 0.0.40
codegen_flags: <defaults>
</compile_context>

<pallas_src>
import math

import jax
import jax.numpy as jnp
from jax.experimental import pallas as pl
from jax.experimental.pallas import tpu as pltpu


def _round_up(x, m):
    return ((x + m - 1) // m) * m


def _cdiv(a, b):
    return -(-a // b)


# ----------------------------- Pallas kernel ------------------------------ #
def _logmel_kernel(frames_ref, dft_ref, fb_ref, out_ref):
    # frames_ref: (TILE_F, n_fft_pad)            bf16   (zero-padded columns)
    # dft_ref   : (n_fft_pad, 2 * n_freqs_pad)   bf16   [cos | -sin], zero-padded rows/cols
    # fb_ref    : (n_freqs_pad, n_mels_pad)      f32    zero-padded rows/cols
    # out_ref   : (TILE_F, n_mels_pad)           f32
    n_freqs_pad = fb_ref.shape[0]

    spec = jnp.dot(frames_ref[...], dft_ref[...],
                   preferred_element_type=jnp.float32)          # (TILE_F, 2*n_freqs_pad)
    re = spec[:, :n_freqs_pad]
    im = spec[:, n_freqs_pad:]
    power = re * re + im * im                                   # |STFT|^2, f32

    mel = jnp.dot(power, fb_ref[...],
                  preferred_element_type=jnp.float32)           # (TILE_F, n_mels_pad), f32
    out_ref[...] = jnp.log(jnp.maximum(mel, 1e-9))


def _vmem_limit_bytes(tile_f, n_fft_pad, two_nf, n_freqs_pad, n_mels_pad):
    bf16, f32 = 2, 4
    frames = tile_f * n_fft_pad * bf16 * 2            # double-buffered streamed input tile
    dft = n_fft_pad * two_nf * bf16                   # Buffered(1): single resident copy
    fb = n_freqs_pad * n_mels_pad * f32               # Buffered(1): single resident copy
    out = tile_f * n_mels_pad * f32 * 2               # double-buffered output tile
    interm = (tile_f * two_nf * f32                   # spec
              + tile_f * n_freqs_pad * f32            # power
              + tile_f * n_mels_pad * f32)            # mel
    total = frames + dft + fb + out + interm
    try:
        physical = pltpu.get_tpu_info().vmem_capacity_bytes
    except Exception:
        physical = 128 << 20                          # v5e/v6e default
    # leave ~20% headroom for Mosaic internal scratch; generous 2x margin on our estimate
    return int(min(int(0.8 * physical), max(2 * total, 32 << 20)))


def _logmel_pallas(frames, dft_mat, fbank, tile_f):
    n_frames_pad, n_fft_pad = frames.shape
    two_nf = dft_mat.shape[1]
    n_freqs_pad, n_mels_pad = fbank.shape
    assert n_frames_pad % tile_f == 0

    grid = (n_frames_pad // tile_f,)
    vmem_bytes = _vmem_limit_bytes(tile_f, n_fft_pad, two_nf, n_freqs_pad, n_mels_pad)

    cost = pl.CostEstimate(
        flops=(2 * n_frames_pad * n_fft_pad * two_nf            # DFT matmul
               + 3 * n_frames_pad * n_freqs_pad                 # power spectrum
               + 2 * n_frames_pad * n_freqs_pad * n_mels_pad    # mel matmul
               + n_frames_pad * n_mels_pad),                    # clamp
        transcendentals=n_frames_pad * n_mels_pad,              # log
        bytes_accessed=(n_frames_pad * n_fft_pad * 2
                        + n_fft_pad * two_nf * 2
                        + n_freqs_pad * n_mels_pad * 4
                        + n_frames_pad * n_mels_pad * 4),
    )

    return pl.pallas_call(
        _logmel_kernel,
        out_shape=jax.ShapeDtypeStruct((n_frames_pad, n_mels_pad), jnp.float32),
        grid=grid,
        in_specs=[
            # streamed frame tiles (double-buffered by default)
            pl.BlockSpec((tile_f, n_fft_pad), lambda i: (i, 0)),
            # VMEM-resident weights: constant index_map -> single buffer
            pl.BlockSpec((n_fft_pad, two_nf), lambda i: (0, 0),
                         pipeline_mode=pl.Buffered(1)),
            pl.BlockSpec((n_freqs_pad, n_mels_pad), lambda i: (0, 0),
                         pipeline_mode=pl.Buffered(1)),
        ],
        out_specs=pl.BlockSpec((tile_f, n_mels_pad), lambda i: (i, 0)),
        compiler_params=pltpu.CompilerParams(
            dimension_semantics=("parallel",),    # frame tiles independent -> megacore on v7x
            vmem_limit_bytes=vmem_bytes,
        ),
        cost_estimate=cost,
    )(frames, dft_mat, fbank)


# --------------------------- parameter builders ---------------------------- #
def _hz_to_mel_htk(hz):
    return 2595.0 * jnp.log10(1.0 + hz / 700.0)


def _mel_to_hz_htk(mel):
    return 700.0 * (10.0 ** (mel / 2595.0) - 1.0)


def _melscale_fbanks(n_freqs, f_min, f_max, n_mels, sample_rate, n_freqs_pad, n_mels_pad):
    """torchaudio.functional.melscale_fbanks (htk scale, norm=None), zero-padded to
    (n_freqs_pad, n_mels_pad)."""
    all_freqs = jnp.linspace(0.0, sample_rate / 2.0, n_freqs)          # (n_freqs,)
    m_min = _hz_to_mel_htk(jnp.asarray(f_min, jnp.float32))
    m_max = _hz_to_mel_htk(jnp.asarray(f_max, jnp.float32))
    m_pts = jnp.linspace(m_min, m_max, n_mels + 2)
    f_pts = _mel_to_hz_htk(m_pts)                                      # (n_mels+2,)
    f_diff = f_pts[1:] - f_pts[:-1]                                    # (n_mels+1,)
    slopes = f_pts[None, :] - all_freqs[:, None]                       # (n_freqs, n_mels+2)
    down = -slopes[:, :-2] / f_diff[:-1]
    up = slopes[:, 2:] / f_diff[1:]
    fb = jnp.maximum(0.0, jnp.minimum(down, up)).astype(jnp.float32)   # (n_freqs, n_mels)

    fb_pad = jnp.zeros((n_freqs_pad, n_mels_pad), jnp.float32)
    fb_pad = fb_pad.at[:n_freqs, :n_mels].set(fb)
    return fb_pad


def _dft_matrix(n_fft, n_fft_pad, n_freqs_pad):
    """Fused [cos | -sin] real-DFT basis with periodic Hann window folded in.
    Shape (n_fft_pad, 2 * n_freqs_pad); padded rows/columns are zero."""
    n_freqs = n_fft // 2 + 1
    n = jnp.arange(n_fft, dtype=jnp.float32)[:, None]                  # (n_fft, 1)
    k = jnp.arange(n_freqs, dtype=jnp.float32)[None, :]                # (1, n_freqs)
    window = 0.5 - 0.5 * jnp.cos(2.0 * math.pi * n / n_fft)            # torch.hann_window(periodic)
    ang = 2.0 * math.pi * n * k / n_fft
    cos_mat = (window * jnp.cos(ang)).astype(jnp.float32)
    sin_mat = (-window * jnp.sin(ang)).astype(jnp.float32)

    dft = jnp.zeros((n_fft_pad, 2 * n_freqs_pad), jnp.float32)
    dft = dft.at[:n_fft, :n_freqs].set(cos_mat)
    dft = dft.at[:n_fft, n_freqs_pad:n_freqs_pad + n_freqs].set(sin_mat)
    return dft


# ------------------------------ module wrapper ------------------------------ #
class LogMelspectrogramPallas:
    """JAX/Pallas port of the PyTorch LogMelspectrogram module (power=2 spectrogram,
    center=True reflect padding, HTK mel scale, norm=None)."""

    def __init__(self, sample_rate, fft_window_ms, fft_hop_ms, f_min, n_mels,
                 max_tile_f=256):
        self.sample_rate = sample_rate
        self.hop_length = int(sample_rate * fft_hop_ms / 1000)
        self.n_fft = int(sample_rate * fft_window_ms / 1000)
        self.n_freqs = self.n_fft // 2 + 1
        self.n_mels = n_mels
        self.max_tile_f = _round_up(max(max_tile_f, 16), 16)

        # Lane/MXU-aligned padded dims (zero padding -> numerically identical result).
        # Contraction dim (n_fft) aligned to 256 on the big matmul where it helps.
        self.n_fft_pad = _round_up(self.n_fft, 256 if self.n_fft > 256 else 128)
        self.n_freqs_pad = _round_up(self.n_freqs, 128)
        self.n_mels_pad = _round_up(max(n_mels, 128), 128)

        # bf16 DFT basis (MXU throughput, f32 accumulation in-kernel);
        # mel filterbank kept in f32 for tighter parity on quiet bins.
        self.dft_mat = _dft_matrix(self.n_fft, self.n_fft_pad,
                                   self.n_freqs_pad).astype(jnp.bfloat16)
        self.fbank = _melscale_fbanks(
            self.n_freqs, f_min, sample_rate / 2.0, n_mels, sample_rate,
            self.n_freqs_pad, self.n_mels_pad,
        )  # f32

    def _frame(self, wav):
        """center=True reflect pad + frame. Built from ceil(n_fft/hop) static strided
        slices + one concat -> no materialized int32 gather index in HBM."""
        wav = jnp.asarray(wav, jnp.float32).reshape(-1)                # (T,)
        pad = self.n_fft // 2
        if wav.shape[0] <= pad:
            raise ValueError("waveform must be longer than n_fft//2 for reflect padding")
        padded = jnp.pad(wav, (pad, pad), mode="reflect")              # center=True
        hop = self.hop_length
        n_frames = 1 + (padded.shape[0] - self.n_fft) // hop

        n_strides = _cdiv(self.n_fft, hop)
        need = (n_frames + n_strides - 1) * hop
        if padded.shape[0] < need:
            padded = jnp.pad(padded, (0, need - padded.shape[0]))

        cols = []
        for j in range(n_strides):                                     # small static loop
            width = min(hop, self.n_fft - j * hop)
            chunk = padded[j * hop: j * hop + n_frames * hop].reshape(n_frames, hop)
            cols.append(chunk[:, :width])
        frames = jnp.concatenate(cols, axis=1)                         # (n_frames, n_fft)
        # TODO(synk): fully fuse framing into the kernel (pl.ANY waveform input + manual
        # make_async_copy of one contiguous window per tile) to remove the remaining
        # overlapped-frames HBM traffic; kept as gather-free JAX glue here.
        return frames.astype(jnp.bfloat16), n_frames

    def __call__(self, wav):
        frames, n_frames = self._frame(wav)                            # (n_frames, n_fft) bf16
        # tile_f: multiple of 16 (bf16 sublane packing / f32 out rows), sized so the
        # grid has ~8+ steps for long clips (pipelining + v7x megacore), capped.
        tile_f = max(16, min(self.max_tile_f, _round_up(_cdiv(n_frames, 8), 16)))
        n_frames_pad = _round_up(n_frames, tile_f)
        frames = jnp.pad(frames, ((0, n_frames_pad - n_frames),
                                  (0, self.n_fft_pad - self.n_fft)))   # zero pad rows+cols
        out = _logmel_pallas(frames, self.dft_mat, self.fbank, tile_f)
        return out[:n_frames, :self.n_mels]                            # drop padding


# Pure-JAX reference using identical numerics (bf16 DFT matmul / f32 accumulation,
# f32 mel projection).
def _reference(module, wav):
    frames, n_frames = module._frame(wav)
    frames = jnp.pad(frames, ((0, 0), (0, module.n_fft_pad - module.n_fft)))
    spec = jnp.dot(frames, module.dft_mat, preferred_element_type=jnp.float32)
    nfp = module.n_freqs_pad
    re = spec[:, :nfp]
    im = spec[:, nfp:]
    power = re * re + im * im
    mel = jnp.dot(power, module.fbank, preferred_element_type=jnp.float32)
    return jnp.log(jnp.maximum(mel, 1e-9))[:, :module.n_mels]


if __name__ == "__main__":
    # Small, module-consistent config: n_fft = 64, hop = 32, n_mels = 16.
    sample_rate = 1600
    fft_window_ms = 40.0
    fft_hop_ms = 20.0
    f_min = 0.0
    n_mels = 16

    module = LogMelspectrogramPallas(sample_rate, fft_window_ms, fft_hop_ms, f_min, n_mels)

    key = jax.random.PRNGKey(0)
    wav = jax.random.normal(key, (512,), dtype=jnp.float32)            # waveform, shape (T,)

    out = module(wav)
    out = jax.block_until_ready(out)

    ref = _reference(module, wav)
    assert out.shape == ref.shape == (17, n_mels), out.shape
    assert bool(jnp.all(jnp.isfinite(out))), "non-finite output"
    assert jnp.allclose(out, ref, rtol=2e-2, atol=2e-2), "mismatch vs reference"

    print("KERNEL_OK")
</pallas_src>

<mosaic_0001>
module attributes {stable_mosaic.version = 11 : i64} {
  func.func @_logmel_kernel(%arg0: i32, %arg1: memref<16x128xbf16, #tpu.memory_space<vmem>>, %arg2: memref<128x256xbf16, #tpu.memory_space<vmem>>, %arg3: memref<128x128xf32, #tpu.memory_space<vmem>>, %arg4: memref<16x128xf32, #tpu.memory_space<vmem>>) attributes {dimension_semantics = [#tpu.dimension_semantics<parallel>], iteration_bounds = array<i64: 2>, scalar_prefetch = 0 : i64, scratch_operands = 0 : i64, tpu.core_type = #tpu.core_type<tc>, window_params = [{transform_indices = @transform_0, window_bounds = array<i64: 16, 128>}, {pipeline_mode = #tpu.pipeline_mode<synchronous>, transform_indices = @transform_1, window_bounds = array<i64: 128, 256>}, {pipeline_mode = #tpu.pipeline_mode<synchronous>, transform_indices = @transform_2, window_bounds = array<i64: 128, 128>}, {transform_indices = @transform_3, window_bounds = array<i64: 16, 128>}]} {
    %c0 = arith.constant 0 : index
    %c0_0 = arith.constant 0 : index
    %0 = vector.load %arg1[%c0, %c0_0] : memref<16x128xbf16, #tpu.memory_space<vmem>>, vector<16x128xbf16>
    %c0_1 = arith.constant 0 : index
    %c0_2 = arith.constant 0 : index
    %1 = vector.load %arg2[%c0_1, %c0_2] : memref<128x256xbf16, #tpu.memory_space<vmem>>, vector<128x256xbf16>
    %cst = arith.constant dense<0.000000e+00> : vector<16x256xf32>
    %2 = tpu.matmul %0, %1, %cst {dimension_numbers = #tpu.dot_dimension_numbers<[1], [0], [0], [1], [0, 0, 1, 1], [], []>} : vector<16x128xbf16>, vector<128x256xbf16>, vector<16x256xf32> -> vector<16x256xf32>
    %3 = vector.extract_strided_slice %2 {offsets = [0, 0], sizes = [16, 128], strides = [1, 1]} : vector<16x256xf32> to vector<16x128xf32>
    %4 = vector.extract_strided_slice %2 {offsets = [0, 128], sizes = [16, 128], strides = [1, 1]} : vector<16x256xf32> to vector<16x128xf32>
    %5 = arith.mulf %3, %3 : vector<16x128xf32>
    %6 = arith.mulf %4, %4 : vector<16x128xf32>
    %7 = arith.addf %5, %6 : vector<16x128xf32>
    %c0_3 = arith.constant 0 : index
    %c0_4 = arith.constant 0 : index
    %8 = vector.load %arg3[%c0_3, %c0_4] : memref<128x128xf32, #tpu.memory_space<vmem>>, vector<128x128xf32>
    %cst_5 = arith.constant dense<0.000000e+00> : vector<16x128xf32>
    %9 = tpu.matmul %7, %8, %cst_5 {dimension_numbers = #tpu.dot_dimension_numbers<[1], [0], [0], [1], [0, 0, 1, 1], [], []>} : vector<16x128xf32>, vector<128x128xf32>, vector<16x128xf32> -> vector<16x128xf32>
    %cst_6 = arith.constant 9.99999971E-10 : f32
    %10 = vector.broadcast %cst_6 : f32 to vector<16x128xf32>
    %11 = arith.maximumf %9, %10 : vector<16x128xf32>
    %12 = math.log %11 : vector<16x128xf32>
    %c0_7 = arith.constant 0 : index
    %c0_8 = arith.constant 0 : index
    %13 = vector.load %arg4[%c0_7, %c0_8] : memref<16x128xf32, #tpu.memory_space<vmem>>, vector<16x128xf32>
    tpu.vector_store %arg4[%c0_7, %c0_8], %12 {strides = array<i32>} : memref<16x128xf32, #tpu.memory_space<vmem>>, vector<16x128xf32>,
    return
  }
  func.func @transform_0(%arg0: i32) -> (i32, i32) {
    %c0_i32 = arith.constant 0 : i32
    %c0_i32_0 = arith.constant 0 : i32
    return %arg0, %c0_i32 : i32, i32
  }
  func.func @transform_1(%arg0: i32) -> (i32, i32) {
    %c0_i32 = arith.constant 0 : i32
    %c0_i32_0 = arith.constant 0 : i32
    %c0_i32_1 = arith.constant 0 : i32
    return %c0_i32, %c0_i32_0 : i32, i32
  }
  func.func @transform_2(%arg0: i32) -> (i32, i32) {
    %c0_i32 = arith.constant 0 : i32
    %c0_i32_0 = arith.constant 0 : i32
    %c0_i32_1 = arith.constant 0 : i32
    return %c0_i32, %c0_i32_0 : i32, i32
  }
  func.func @transform_3(%arg0: i32) -> (i32, i32) {
    %c0_i32 = arith.constant 0 : i32
    %c0_i32_0 = arith.constant 0 : i32
    return %arg0, %c0_i32 : i32, i32
  }
}

</mosaic_0001>

<llo_original>
// kernel: tpu_custom_call.1
$region0: #{tpu_custom_call.1}
  #allocation0 [shape = 'u32[]', space=smem, size = 0x4, offset = 0x4, fixed_abs, tag = 'smem constant byte address 0x4 - core index']
  #allocation1 [shape = 'u32[144,128]{1,0:T(1,128)}', space=vmem, size = 0x12000, scoped, tag = 'internal scratch']
  %s0 = inlined_call_operand.hbm [shape: bf16[32,128], index: 0, kind: input, shape index: {}]
  %s1 = inlined_call_operand.hbm [shape: bf16[128,256], index: 1, kind: input, shape index: {}]
  %s2 = inlined_call_operand.hbm [shape: f32[128,128], index: 2, kind: input, shape index: {}]
  %s3 = inlined_call_operand.hbm [shape: f32[32,128], index: 3, kind: output, shape index: {}]
  %s4 = sld [smem:[#allocation0]]
  $region57: #{tpu_custom_call.1} parent=0
    _
  %s6 = ssub.s32 1, %s4
  %s7 = scalar_select 0, %s6, %s4
  $region1: #{tpu_custom_call.1} parent=0
    #allocation2 [shape = 'u8[8192]{0}', space=vmem, size = 0x2000, scoped, tag = 'input window, operand 0']
    #allocation3 [shape = 's32[2]{0}', space=sflag, size = 0x8, scoped, tag = 'scoped memory for tpu_custom_call.1']
    #allocation4 [shape = 's32[2]{0}', space=sflag, size = 0x8, scoped, tag = 'scoped memory for tpu_custom_call.1']
    #allocation5 [shape = 'u8[65536]{0}', space=vmem, size = 0x10000, scoped, tag = 'input window, operand 1, single buffered']
    #allocation6 [shape = 's32[1]{0}', space=sflag, size = 0x4, scoped, tag = 'scoped memory for tpu_custom_call.1']
    #allocation7 [shape = 'u8[65536]{0}', space=vmem, size = 0x10000, scoped, tag = 'input window, operand 2, single buffered']
    #allocation8 [shape = 'u8[16384]{0}', space=vmem, size = 0x4000, scoped, tag = 'output window, operand 0']
    %8 = vsyncpa [#allocation3], 0
    %s9 = scalar_lea.sflag [#allocation3], 1
    %10 = vsyncpa %s9, 0
    %11 = vsyncpa [#allocation6], 0
    %12 = vsyncpa [#allocation4], 0
    %s13 = scalar_lea.sflag [#allocation4], 1
    %14 = vsyncpa %s13, 0
    loop: start=0, step=1, limit=4
    $region2: #{tpu_custom_call.1} parent=1 // loop_pre_header
      _
    $region3: #{tpu_custom_call.1} parent=1 // loop_header
      %s16 = sphi 0, %s20
      %p17 = scmp.ge.s32.totalorder %s16, 4
      %s26 = sphi 0, %s28
      %s29 = sphi 0, %s26
      %s30 = sphi 0, %s29
      %s46 = sphi 0, %s30
      %s50 = sphi 0, %s50
      %s52 = sphi 0, %s50
      %s53 = sphi 0, %s52
      %s67 = sphi 0, %s53
      %s71 = sphi 0, %s71
      %s73 = sphi 0, %s71
      %s74 = sphi 0, %s73
      %s88 = sphi 0, %s74
      %s94 = sphi 0, %s96
      %s97 = sphi 0, %s94
      %s98 = sphi 0, %s97
      %s114 = sphi 0, %s98
    $region4: #{tpu_custom_call.1} parent=1 // loop_header_branch
      %19 = sbr.rel (%p17) target = $region8
    $region5: #{tpu_custom_call.1} parent=1 // loop_body
      %s21 = ssub.s32 %s16, 1
      %s22 = ssub.s32 %s16, 2
      %s23 = sadd.s32 %s16, 1
      %s24 = ssub.s32 %s16, %s23
      %p25 = scmp.eq.s32.totalorder %s24, 0
      %s27 = sadd.s32 %s26, 1
      %s28 = scalar_select %p25, %s26, %s27
      %p31 = pneg %p25
      %p32 = scmp.eq.s32.totalorder %s16, 1
      %p33 = por %p31, %p32
      %p34 = scmp.ne.s32.totalorder %s26, %s29
      %p35 = scmp.eq.s32.totalorder %s16, 0
      %p36 = por %p34, %p35
      %p37 = scmp.ne.s32.totalorder %s26, %s29
      %p38 = scmp.eq.s32.totalorder %s21, 1
      %p39 = por %p37, %p38
      %p40 = scmp.ne.s32.totalorder %s29, %s30
      %p41 = scmp.eq.s32.totalorder %s21, 0
      %p42 = por %p40, %p41
      %p43 = scmp.ne.s32.totalorder %s29, %s30
      %p44 = scmp.eq.s32.totalorder %s22, 1
      %p45 = por %p43, %p44
      %p47 = scmp.ne.s32.totalorder %s30, %s46
      %p48 = scmp.eq.s32.totalorder %s22, 0
      %p49 = por %p47, %p48
      %s51 = sadd.s32 %s50, 1
      %p54 = scmp.eq.s32.totalorder %s16, 1
      %p55 = scmp.ne.s32.totalorder %s50, %s52
      %p56 = scmp.eq.s32.totalorder %s16, 0
      %p57 = por %p55, %p56
      %p58 = scmp.ne.s32.totalorder %s50, %s52
      %p59 = scmp.eq.s32.totalorder %s21, 1
      %p60 = por %p58, %p59
      %p61 = scmp.ne.s32.totalorder %s52, %s53
      %p62 = scmp.eq.s32.totalorder %s21, 0
      %p63 = por %p61, %p62
      %p64 = scmp.ne.s32.totalorder %s52, %s53
      %p65 = scmp.eq.s32.totalorder %s22, 1
      %p66 = por %p64, %p65
      %p68 = scmp.ne.s32.totalorder %s53, %s67
      %p69 = scmp.eq.s32.totalorder %s22, 0
      %p70 = por %p68, %p69
      %s72 = sadd.s32 %s71, 1
      %p75 = scmp.eq.s32.totalorder %s16, 1
      %p76 = scmp.ne.s32.totalorder %s71, %s73
      %p77 = scmp.eq.s32.totalorder %s16, 0
      %p78 = por %p76, %p77
      %p79 = scmp.ne.s32.totalorder %s71, %s73
      %p80 = scmp.eq.s32.totalorder %s21, 1
      %p81 = por %p79, %p80
      %p82 = scmp.ne.s32.totalorder %s73, %s74
      %p83 = scmp.eq.s32.totalorder %s21, 0
      %p84 = por %p82, %p83
      %p85 = scmp.ne.s32.totalorder %s73, %s74
      %p86 = scmp.eq.s32.totalorder %s22, 1
      %p87 = por %p85, %p86
      %p89 = scmp.ne.s32.totalorder %s74, %s88
      %p90 = scmp.eq.s32.totalorder %s22, 0
      %p91 = por %p89, %p90
      %s92 = ssub.s32 %s16, %s23
      %p93 = scmp.eq.s32.totalorder %s92, 0
      %s95 = sadd.s32 %s94, 1
      %s96 = scalar_select %p93, %s94, %s95
      %p99 = pneg %p93
      %p100 = scmp.eq.s32.totalorder %s16, 1
      %p101 = por %p99, %p100
      %p102 = scmp.ne.s32.totalorder %s94, %s97
      %p103 = scmp.eq.s32.totalorder %s16, 0
      %p104 = por %p102, %p103
      %p105 = scmp.ne.s32.totalorder %s94, %s97
      %p106 = scmp.eq.s32.totalorder %s21, 1
      %p107 = por %p105, %p106
      %p108 = scmp.ne.s32.totalorder %s97, %s98
      %p109 = scmp.eq.s32.totalorder %s21, 0
      %p110 = por %p108, %p109
      %p111 = scmp.ne.s32.totalorder %s97, %s98
      %p112 = scmp.eq.s32.totalorder %s22, 1
      %p113 = por %p111, %p112
      %p115 = scmp.ne.s32.totalorder %s98, %s114
      %p116 = scmp.eq.s32.totalorder %s22, 0
      %p117 = por %p115, %p116
      %p118 = scmp.le.s32.totalorder 1, %s16
      %p119 = scmp.lt.s32.totalorder %s16, 3
      %p120 = pnand %p118, %p119
      %p121 = pneg %p120
      // Predicated region
      $region9: #{tpu_custom_call.1} parent=5 // pred_check
        _
      $region10: #{tpu_custom_call.1} parent=5 // pred_check_branch
        %123 = sbr.rel (%p120) target = $region12
      $region11: #{tpu_custom_call.1} parent=5 // pred_region
        %s124 = ssub.s32 %s16, 1
        // Predicated region
        $region13: #{tpu_custom_call.1} parent=11 // pred_check
          %p125 = pneg %p63
        $region14: #{tpu_custom_call.1} parent=11 // pred_check_branch
          %127 = sbr.rel (%p125) target = $region16
        $region15: #{tpu_custom_call.1} parent=11 // pred_region
          %s129 = ssub.s32 2048, 2048
          %130 = vsyncadd [#allocation6], %s129
          %s131 = sshll.u32 [#allocation5], 4
          %s132 = int_to_ptr.vmem [resolvable:$true] %s131
          %137 = dma.hbm_to_vmem [thread:$0]  %s1, 2048, %s132, [#allocation6], 128, 128, 8
        $region16: #{tpu_custom_call.1} parent=11 // pred_fallthru
          _
        // Predicated region
        $region17: #{tpu_custom_call.1} parent=11 // pred_check
          %p138 = pneg %p84
        $region18: #{tpu_custom_call.1} parent=11 // pred_check_branch
          %140 = sbr.rel (%p138) target = $region20
        $region19: #{tpu_custom_call.1} parent=11 // pred_region
          %s142 = ssub.s32 2048, 2048
          %143 = vsyncadd [#allocation6], %s142
          %s144 = sshll.u32 [#allocation7], 4
          %s145 = int_to_ptr.vmem [resolvable:$true] %s144
          %150 = dma.hbm_to_vmem [thread:$0]  %s2, 2048, %s145, [#allocation6], 128, 128, 8
        $region20: #{tpu_custom_call.1} parent=11 // pred_fallthru
          _
      $region12: #{tpu_custom_call.1} parent=5 // pred_fallthru
        _
      %p151 = scmp.lt.s32.totalorder %s16, 2
      // Predicated region
      $region21: #{tpu_custom_call.1} parent=5 // pred_check
        %p152 = pneg %p151
      $region22: #{tpu_custom_call.1} parent=5 // pred_check_branch
        %154 = sbr.rel (%p152) target = $region24
      $region23: #{tpu_custom_call.1} parent=5 // pred_region
        // Predicated region
        $region25: #{tpu_custom_call.1} parent=23 // pred_check
          %p155 = pneg %p36
        $region26: #{tpu_custom_call.1} parent=23 // pred_check_branch
          %157 = sbr.rel (%p155) target = $region28
        $region27: #{tpu_custom_call.1} parent=23 // pred_region
          %s158 = sand.u32 %s26, 1
          %s159 = scalar_lea.sflag [#allocation3], %s158
          %s160 = sand.u32 %s26, 1
          %s161 = smul.addr %s160, 8
          %s162 = scalar_lea.vmem [#allocation2], %s161
          %s163 = smul.u32 2, %s16
          %s165 = ssub.s32 128, 128
          %166 = vsyncadd %s159, %s165
          %s167 = smul.addr %s163, 64
          %s168 = scalar_lea.hbm %s0, %s167
          %s169 = sshll.u32 %s162, 4
          %s170 = int_to_ptr.vmem [resolvable:$true] %s169
          %175 = dma.hbm_to_vmem [thread:$0]  %s168, 128, %s170, %s159, 64, 64, 4
        $region28: #{tpu_custom_call.1} parent=23 // pred_fallthru
          _
      $region24: #{tpu_custom_call.1} parent=5 // pred_fallthru
        _
      %p176 = scmp.le.s32.totalorder 1, %s16
      %p177 = scmp.lt.s32.totalorder %s16, 3
      %p178 = pnand %p176, %p177
      %p179 = pneg %p178
      // Predicated region
      $region29: #{tpu_custom_call.1} parent=5 // pred_check
        _
      $region30: #{tpu_custom_call.1} parent=5 // pred_check_branch
        %181 = sbr.rel (%p178) target = $region32
      $region31: #{tpu_custom_call.1} parent=5 // pred_region
        %s182 = ssub.s32 %s16, 1
        %s183 = sand.u32 %s29, 1
        %s184 = scalar_lea.sflag [#allocation3], %s183
        %s185 = sand.u32 %s29, 1
        %s186 = smul.addr %s185, 8
        %s187 = scalar_lea.vmem [#allocation2], %s186
        // Predicated region
        $region33: #{tpu_custom_call.1} parent=31 // pred_check
          %p188 = pneg %p42
        $region34: #{tpu_custom_call.1} parent=31 // pred_check_branch
          %190 = sbr.rel (%p188) target = $region36
        $region35: #{tpu_custom_call.1} parent=31 // pred_region
          %191 = dma.done %s184, 128
        $region36: #{tpu_custom_call.1} parent=31 // pred_fallthru
          _
        // Predicated region
        $region37: #{tpu_custom_call.1} parent=31 // pred_check
          %p192 = pneg %p63
        $region38: #{tpu_custom_call.1} parent=31 // pred_check_branch
          %194 = sbr.rel (%p192) target = $region40
        $region39: #{tpu_custom_call.1} parent=31 // pred_region
          %195 = dma.done [#allocation6], 2048
        $region40: #{tpu_custom_call.1} parent=31 // pred_fallthru
          _
        // Predicated region
        $region41: #{tpu_custom_call.1} parent=31 // pred_check
          %p196 = pneg %p84
        $region42: #{tpu_custom_call.1} parent=31 // pred_check_branch
          %198 = sbr.rel (%p196) target = $region44
        $region43: #{tpu_custom_call.1} parent=31 // pred_region
          %199 = dma.done [#allocation6], 2048
        $region44: #{tpu_custom_call.1} parent=31 // pred_fallthru
          _
        %s200 = sand.u32 %s29, 1
        %s201 = scalar_lea.sflag [#allocation3], %s200
        %s202 = sand.u32 %s29, 1
        %s203 = smul.addr %s202, 8
        %s204 = scalar_lea.vmem [#allocation2], %s203
        %p205 = pneg %p42
        %p206 = pneg %p39
        %p207 = pneg %p63
        %p208 = pneg %p60
        %p209 = pneg %p84
        %p210 = pneg %p81
        %p211 = pneg %p110
        %p212 = pneg %p107
        %s213 = sand.u32 %s97, 1
        %s214 = scalar_lea.sflag [#allocation4], %s213
        %s215 = sand.u32 %s97, 1
        %s216 = smul.addr %s215, 16
        %s217 = scalar_lea.vmem [#allocation8], %s216
        %s218 = smul.u32 2, %s21
        %s219 = smul.u32 2, %s21
        %v221 = vld [vmem:[%s187] sm:$0xf]
        %v222 = vld [vmem:[%s187 + $0x4] sm:$0xf]
        %v223 = vld [vmem:[#allocation5] sm:$0xff]
        %v224 = vld [vmem:[#allocation5 + $0x8] sm:$0xff]
        %v225 = vld [vmem:[#allocation5 + $0x10] sm:$0xff]
        %v226 = vld [vmem:[#allocation5 + $0x18] sm:$0xff]
        %v227 = vld [vmem:[#allocation5 + $0x20] sm:$0xff]
        %v228 = vld [vmem:[#allocation5 + $0x28] sm:$0xff]
        %v229 = vld [vmem:[#allocation5 + $0x30] sm:$0xff]
        %v230 = vld [vmem:[#allocation5 + $0x38] sm:$0xff]
        %v231 = vld [vmem:[#allocation5 + $0x40] sm:$0xff]
        %v232 = vld [vmem:[#allocation5 + $0x48] sm:$0xff]
        %v233 = vld [vmem:[#allocation5 + $0x50] sm:$0xff]
        %v234 = vld [vmem:[#allocation5 + $0x58] sm:$0xff]
        %v235 = vld [vmem:[#allocation5 + $0x60] sm:$0xff]
        %v236 = vld [vmem:[#allocation5 + $0x68] sm:$0xff]
        %v237 = vld [vmem:[#allocation5 + $0x70] sm:$0xff]
        %v238 = vld [vmem:[#allocation5 + $0x78] sm:$0xff]
        %v241 = vunpack.c.l.b16 %v221
        %v242 = vunpack.c.l.b16 %v222
        %v243 = vpack.c.b16 %v242, %v241
        %v261 = vunpack.c.l.b16 %v223
        %v262 = vunpack.c.h.b16 %v223
        %v263 = vunpack.c.l.b16 %v224
        %v264 = vunpack.c.h.b16 %v224
        %v265 = vunpack.c.l.b16 %v225
        %v266 = vunpack.c.h.b16 %v225
        %v267 = vunpack.c.l.b16 %v226
        %v268 = vunpack.c.h.b16 %v226
        %v269 = vunpack.c.l.b16 %v227
        %v270 = vunpack.c.h.b16 %v227
        %v271 = vunpack.c.l.b16 %v228
        %v272 = vunpack.c.h.b16 %v228
        %v273 = vunpack.c.l.b16 %v229
        %v274 = vunpack.c.h.b16 %v229
        %v275 = vunpack.c.l.b16 %v230
        %v276 = vunpack.c.h.b16 %v230
        %v277 = vunpack.c.l.b16 %v231
        %v278 = vunpack.c.h.b16 %v231
        %v279 = vunpack.c.l.b16 %v232
        %v280 = vunpack.c.h.b16 %v232
        %v281 = vunpack.c.l.b16 %v233
        %v282 = vunpack.c.h.b16 %v233
        %v283 = vunpack.c.l.b16 %v234
        %v284 = vunpack.c.h.b16 %v234
        %v285 = vunpack.c.l.b16 %v235
        %v286 = vunpack.c.h.b16 %v235
        %v287 = vunpack.c.l.b16 %v236
        %v288 = vunpack.c.h.b16 %v236
        %v289 = vunpack.c.l.b16 %v237
        %v290 = vunpack.c.h.b16 %v237
        %v291 = vunpack.c.l.b16 %v238
        %v292 = vunpack.c.h.b16 %v238
        %v293 = vpack.c.b16 %v263, %v261
        %v294 = vpack.c.b16 %v264, %v262
        %v295 = vpack.c.b16 %v267, %v265
        %v296 = vpack.c.b16 %v268, %v266
        %v297 = vpack.c.b16 %v271, %v269
        %v298 = vpack.c.b16 %v272, %v270
        %v299 = vpack.c.b16 %v275, %v273
        %v300 = vpack.c.b16 %v276, %v274
        %v301 = vpack.c.b16 %v279, %v277
        %v302 = vpack.c.b16 %v280, %v278
        %v303 = vpack.c.b16 %v283, %v281
        %v304 = vpack.c.b16 %v284, %v282
        %v305 = vpack.c.b16 %v287, %v285
        %v306 = vpack.c.b16 %v288, %v286
        %v307 = vpack.c.b16 %v291, %v289
        %v308 = vpack.c.b16 %v292, %v290
        %325 = vmatprep.subr.bf16.mxu0 %v294
        %326 = vmatpush1.bf16.msra.mxu0 %v293
        %327 = vmatprep.subr.bf16.mxu0 %v296
        %328 = vmatpush1.bf16.msra.mxu0 %v295
        %329 = vmatprep.subr.bf16.mxu0 %v298
        %330 = vmatpush1.bf16.msra.mxu0 %v297
        %331 = vmatprep.subr.bf16.mxu0 %v300
        %332 = vmatpush1.bf16.msra.mxu0 %v299
        %333 = vmatprep.subr.bf16.mxu0 %v302
        %334 = vmatpush1.bf16.msra.mxu0 %v301
        %335 = vmatprep.subr.bf16.mxu0 %v304
        %336 = vmatpush1.bf16.msra.mxu0 %v303
        %337 = vmatprep.subr.bf16.mxu0 %v306
        %338 = vmatpush1.bf16.msra.mxu0 %v305
        %339 = vmatprep.subr.bf16.mxu0 %v308
        %340 = vmatpush1.bf16.msra.mxu0 %v307
        %341 = vmatprep.subr.bf16.mxu0 0
        %342 = vmatpush1.bf16.msra.mxu0 0
        %343 = vmatprep.subr.bf16.mxu0 0
        %344 = vmatpush1.bf16.msra.mxu0 0
        %345 = vmatprep.subr.bf16.mxu0 0
        %346 = vmatpush1.bf16.msra.mxu0 0
        %347 = vmatprep.subr.bf16.mxu0 0
        %348 = vmatpush1.bf16.msra.mxu0 0
        %349 = vmatprep.subr.bf16.mxu0 0
        %350 = vmatpush1.bf16.msra.mxu0 0
        %351 = vmatprep.subr.bf16.mxu0 0
        %352 = vmatpush1.bf16.msra.mxu0 0
        %353 = vmatprep.subr.bf16.mxu0 0
        %354 = vmatpush1.bf16.msra.mxu0 0
        %355 = vmatprep.subr.bf16.mxu0 0
        %356 = vmatpush1.bf16.msra.mxu0 0
        %357 = vmatprep.mubr.bf16.mxu0 0
        %358 = vmatmul.mubr.bf16.gmra.mrb[0].mxu0 %v243
        %v359 = vpop.f32.mrb[0].mxu0
        %v360 = vadd.f32 0.0, %v359
        %v361 = vpop.f32.mrb[0].mxu0
        %v362 = vadd.f32 0.0, %v361
        %v363 = vpop.f32.mrb[0].mxu0
        %v364 = vadd.f32 0.0, %v363
        %v365 = vpop.f32.mrb[0].mxu0
        %v366 = vadd.f32 0.0, %v365
        %367 = vdwg.mxu0
        %v368 = vmul.f32 %v360, %v360
        %v369 = vmul.f32 %v364, %v364
        %v370 = vmul.f32 %v362, %v362
        %v371 = vmul.f32 %v366, %v366
        %v372 = vadd.f32 %v368, %v370
        %v373 = vadd.f32 %v369, %v371
        %v374 = vld [vmem:[#allocation7] sm:$0xff]
        %v375 = vld [vmem:[#allocation7 + $0x8] sm:$0xff]
        %v376 = vld [vmem:[#allocation7 + $0x10] sm:$0xff]
        %v377 = vld [vmem:[#allocation7 + $0x18] sm:$0xff]
        %v378 = vld [vmem:[#allocation7 + $0x20] sm:$0xff]
        %v379 = vld [vmem:[#allocation7 + $0x28] sm:$0xff]
        %v380 = vld [vmem:[#allocation7 + $0x30] sm:$0xff]
        %v381 = vld [vmem:[#allocation7 + $0x38] sm:$0xff]
        %v382 = vld [vmem:[#allocation7 + $0x40] sm:$0xff]
        %v383 = vld [vmem:[#allocation7 + $0x48] sm:$0xff]
        %v384 = vld [vmem:[#allocation7 + $0x50] sm:$0xff]
        %v385 = vld [vmem:[#allocation7 + $0x58] sm:$0xff]
        %v386 = vld [vmem:[#allocation7 + $0x60] sm:$0xff]
        %v387 = vld [vmem:[#allocation7 + $0x68] sm:$0xff]
        %v388 = vld [vmem:[#allocation7 + $0x70] sm:$0xff]
        %v389 = vld [vmem:[#allocation7 + $0x78] sm:$0xff]
        %390 = vmatprep.subr.mxu0 0.0
        %391 = vmatpush1.msra.mxu0 %v374
        %392 = vmatprep.subr.mxu0 0.0
        %393 = vmatpush1.msra.mxu0 %v375
        %394 = vmatprep.subr.mxu0 0.0
        %395 = vmatpush1.msra.mxu0 %v376
        %396 = vmatprep.subr.mxu0 0.0
        %397 = vmatpush1.msra.mxu0 %v377
        %398 = vmatprep.subr.mxu0 0.0
        %399 = vmatpush1.msra.mxu0 %v378
        %400 = vmatprep.subr.mxu0 0.0
        %401 = vmatpush1.msra.mxu0 %v379
        %402 = vmatprep.subr.mxu0 0.0
        %403 = vmatpush1.msra.mxu0 %v380
        %404 = vmatprep.subr.mxu0 0.0
        %405 = vmatpush1.msra.mxu0 %v381
        %406 = vmatprep.subr.mxu0 0.0
        %407 = vmatpush1.msra.mxu0 %v382
        %408 = vmatprep.subr.mxu0 0.0
        %409 = vmatpush1.msra.mxu0 %v383
        %410 = vmatprep.subr.mxu0 0.0
        %411 = vmatpush1.msra.mxu0 %v384
        %412 = vmatprep.subr.mxu0 0.0
        %413 = vmatpush1.msra.mxu0 %v385
        %414 = vmatprep.subr.mxu0 0.0
        %415 = vmatpush1.msra.mxu0 %v386
        %416 = vmatprep.subr.mxu0 0.0
        %417 = vmatpush1.msra.mxu0 %v387
        %418 = vmatprep.subr.mxu0 0.0
        %419 = vmatpush1.msra.mxu0 %v388
        %420 = vmatprep.subr.mxu0 0.0
        %421 = vmatpush1.msra.mxu0 %v389
        %422 = vmatprep.subr.mxu0 0.0
        %423 = vmatpush1.msra.mxu0 0.0
        %424 = vmatprep.subr.mxu0 0.0
        %425 = vmatpush1.msra.mxu0 0.0
        %426 = vmatprep.subr.mxu0 0.0
        %427 = vmatpush1.msra.mxu0 0.0
        %428 = vmatprep.subr.mxu0 0.0
        %429 = vmatpush1.msra.mxu0 0.0
        %430 = vmatprep.subr.mxu0 0.0
        %431 = vmatpush1.msra.mxu0 0.0
        %432 = vmatprep.subr.mxu0 0.0
        %433 = vmatpush1.msra.mxu0 0.0
        %434 = vmatprep.subr.mxu0 0.0
        %435 = vmatpush1.msra.mxu0 0.0
        %436 = vmatprep.subr.mxu0 0.0
        %437 = vmatpush1.msra.mxu0 0.0
        %438 = vmatprep.subr.mxu0 0.0
        %439 = vmatpush1.msra.mxu0 0.0
        %440 = vmatprep.subr.mxu0 0.0
        %441 = vmatpush1.msra.mxu0 0.0
        %442 = vmatprep.subr.mxu0 0.0
        %443 = vmatpush1.msra.mxu0 0.0
        %444 = vmatprep.subr.mxu0 0.0
        %445 = vmatpush1.msra.mxu0 0.0
        %446 = vmatprep.subr.mxu0 0.0
        %447 = vmatpush1.msra.mxu0 0.0
        %448 = vmatprep.subr.mxu0 0.0
        %449 = vmatpush1.msra.mxu0 0.0
        %450 = vmatprep.subr.mxu0 0.0
        %451 = vmatpush1.msra.mxu0 0.0
        %452 = vmatprep.subr.mxu0 0.0
        %453 = vmatpush1.msra.mxu0 0.0
        %454 = vmatprep.mubr.f32.mxu0 0.0
        %455 = vmatmul.mubr.f32.gmra.mrb[0].mxu0 %v372
        %v456 = vpop.f32.mrb[0].mxu0
        %v457 = vadd.f32 0.0, %v456
        %v458 = vpop.f32.mrb[0].mxu0
        %459 = vmatprep.mubr.f32.mxu0 0.0
        %460 = vmatmul.mubr.f32.gmra.mrb[0].mxu0 %v373
        %v461 = vpop.f32.mrb[0].mxu0
        %v462 = vadd.f32 0.0, %v461
        %v463 = vpop.f32.mrb[0].mxu0
        %464 = vdwg.mxu0
        %v465 = vmax.f32 %v457, 1e-09
        %v466 = vmax.f32 %v462, 1e-09
        %v467 = vlog2.pop %v465
        %v468 = vmul.f32 %v467, 0.6931472
        %v469 = vlog2.pop %v466
        %v470 = vmul.f32 %v469, 0.6931472
        %471 = vst [vmem:[%s217] sm:$0xff] %v468
        %472 = vst [vmem:[%s217 + $0x8] sm:$0xff] %v470
        %s473 = sand.u32 %s97, 1
        %s474 = scalar_lea.sflag [#allocation4], %s473
        %s475 = sand.u32 %s97, 1
        %s476 = smul.addr %s475, 16
        %s477 = scalar_lea.vmem [#allocation8], %s476
        // Predicated region
        $region45: #{tpu_custom_call.1} parent=31 // pred_check
          %p478 = pneg %p107
        $region46: #{tpu_custom_call.1} parent=31 // pred_check_branch
          %480 = sbr.rel (%p478) target = $region48
        $region47: #{tpu_custom_call.1} parent=31 // pred_region
          %s481 = smul.u32 2, %s21
          %s483 = ssub.s32 256, 256
          %484 = vsyncadd %s474, %s483
          %s485 = smul.addr %s481, 128
          %s486 = scalar_lea.hbm %s3, %s485
          %s487 = sshll.u32 %s477, 4
          %s488 = int_to_ptr.vmem [resolvable:$true] %s487
          %493 = dma.vmem_to_hbm [thread:$0]  %s488, 256, %s486, %s474, 128, 128, 8
        $region48: #{tpu_custom_call.1} parent=31 // pred_fallthru
          _
      $region32: #{tpu_custom_call.1} parent=5 // pred_fallthru
        _
      %p494 = scmp.le.s32.totalorder 2, %s16
      // Predicated region
      $region49: #{tpu_custom_call.1} parent=5 // pred_check
        %p495 = pneg %p494
      $region50: #{tpu_custom_call.1} parent=5 // pred_check_branch
        %497 = sbr.rel (%p495) target = $region52
      $region51: #{tpu_custom_call.1} parent=5 // pred_region
        %s498 = ssub.s32 %s16, 2
        // Predicated region
        $region53: #{tpu_custom_call.1} parent=51 // pred_check
          %p499 = pneg %p113
        $region54: #{tpu_custom_call.1} parent=51 // pred_check_branch
          %501 = sbr.rel (%p499) target = $region56
        $region55: #{tpu_custom_call.1} parent=51 // pred_region
          %s502 = sand.u32 %s98, 1
          %s503 = scalar_lea.sflag [#allocation4], %s502
          %s504 = sand.u32 %s98, 1
          %s505 = smul.addr %s504, 16
          %s506 = scalar_lea.vmem [#allocation8], %s505
          %507 = dma.done %s503, 256
        $region56: #{tpu_custom_call.1} parent=51 // pred_fallthru
          _
      $region52: #{tpu_custom_call.1} parent=5 // pred_fallthru
        _
    $region6: #{tpu_custom_call.1} parent=1 // loop_footer
      %s20 = sadd.s32 1, %s16
    $region7: #{tpu_custom_call.1} parent=1 // loop_footer_branch
      %15 = sbr.rel target = $region3
    $region8: #{tpu_custom_call.1} parent=1 // loop_exit
      _
    %508 = vsyncpa [#allocation3], 1
    %s509 = scalar_lea.sflag [#allocation3], 1
    %510 = vsyncpa %s509, 1
    %511 = vsyncpa [#allocation6], 1
    %512 = vsyncpa [#allocation4], 1
    %s513 = scalar_lea.sflag [#allocation4], 1
    %514 = vsyncpa %s513, 1

</llo_original>
